<compile_context>
chip_gen: v7x
topology: tpu7x:2x2x1
jax: 0.10.0
libtpu: 0.0.40
codegen_flags: <defaults>
</compile_context>

<pallas_src>
import jax
import jax.numpy as jnp
from jax.experimental import pallas as pl
from jax.experimental.pallas import tpu as pltpu


def _generator_kernel(x_ref, w1_ref, b1_ref, w2_ref, b2_ref, out_ref):
    # ---- Linear 1: x @ W1 + b1 (MXU, f32 accumulate) ----
    h = jnp.dot(x_ref[...], w1_ref[...], preferred_element_type=jnp.float32)
    h = h + b1_ref[...]                      # (1, hidden) broadcasts over tile

    # ---- LeakyReLU(negative_slope=0.2): slope < 1 => max(h, 0.2*h) ----
    h = jnp.maximum(h, 0.2 * h)

    # ---- Dropout(p): identity in eval mode ----

    # ---- Linear 2: h @ W2 + b2 (MXU, f32 accumulate) ----
    # Feed the MXU in the weight dtype (bf16 on the fast path, f32 otherwise).
    out = jnp.dot(h.astype(w2_ref.dtype), w2_ref[...],
                  preferred_element_type=jnp.float32)
    out = out + b2_ref[...]

    out_ref[...] = out.astype(out_ref.dtype)


def _round_up(x, m):
    return ((x + m - 1) // m) * m


def generator_forward(noise, w1, b1, w2, b2, *, tile_b=1024,
                      compute_dtype=jnp.bfloat16, out_dtype=None):
    """Generator forward.

    noise: (B, noise_size) ; w1: (noise_size, hidden) ; b1: (hidden,) or (1, hidden)
    w2: (hidden, output_size) ; b2: (output_size,) or (1, output_size)
    Returns (B, output_size) in `out_dtype` (default: noise.dtype).

    compute_dtype: dtype used for noise/weights on the MXU (default bf16,
    native MXU dtype and half the DMA bytes); accumulation stays f32.
    Pass None to keep the inputs' dtype (exact f32 path).
    """
    if out_dtype is None:
        out_dtype = noise.dtype
    B, noise_size = noise.shape
    hidden = w1.shape[1]
    output_size = w2.shape[1]

    b1 = jnp.asarray(b1).reshape(1, hidden).astype(jnp.float32)
    b2 = jnp.asarray(b2).reshape(1, output_size).astype(jnp.float32)

    # Lane-dense output: pad the output feature dim to a multiple of 128 so the
    # writeback uses full (unmasked) vector stores.  No-op for lane-dense sizes.
    out_p = _round_up(output_size, 128)
    if out_p != output_size:
        w2 = jnp.pad(w2, ((0, 0), (0, out_p - output_size)))
        b2 = jnp.pad(b2, ((0, 0), (0, out_p - output_size)))

    if compute_dtype is not None:
        noise = noise.astype(compute_dtype)
        w1 = w1.astype(compute_dtype)
        w2 = w2.astype(compute_dtype)

    in_itemsize = jnp.dtype(noise.dtype).itemsize
    out_itemsize = jnp.dtype(out_dtype).itemsize
    w_itemsize = jnp.dtype(w1.dtype).itemsize
    # Sub-32-bit dtypes pack 2 rows per sublane -> round batch tiling to 16.
    sub = 16 if min(in_itemsize, out_itemsize) == 2 else 8

    # Pad the batch only to sublane granularity (NOT to a tile multiple): the
    # partial last grid block is masked on store by Pallas, so large batches
    # avoid the extra HBM round-trip a full jnp.pad / out-slice would cost.
    b_pad = _round_up(B, sub)
    if b_pad != B:
        noise = jnp.pad(noise, ((0, b_pad - B), (0, 0)))

    tile = max(sub, (min(int(tile_b), b_pad) // sub) * sub)
    # Guarantee >= 2 grid steps when possible so the "parallel" batch axis can
    # shard across both TensorCores on v7x (and the DMA pipeline has work).
    if pl.cdiv(b_pad, tile) < 2 and b_pad >= 2 * sub:
        tile = max(sub, ((b_pad // 2) // sub) * sub)
    grid = (pl.cdiv(b_pad, tile),)

    # Advisory cost estimate for XLA's scheduler around the custom call.
    flops = 2 * b_pad * (noise_size * hidden + hidden * out_p)
    bytes_accessed = (b_pad * noise_size * in_itemsize
                      + b_pad * out_p * out_itemsize
                      + (noise_size * hidden + hidden * out_p) * w_itemsize
                      + (hidden + out_p) * 4)
    cost = pl.CostEstimate(flops=int(flops), transcendentals=0,
                           bytes_accessed=int(bytes_accessed))

    # Rough VMEM footprint (double-buffered activations/weights + f32
    # intermediates); raise the scoped limit only when the default would be
    # tight (v5e default 16 MiB, v6e/v7x 32 MiB).
    est_vmem = (2 * tile * noise_size * in_itemsize
                + 2 * tile * out_p * out_itemsize
                + 2 * (noise_size * hidden + hidden * out_p) * w_itemsize
                + 2 * (hidden + out_p) * 4
                + tile * (hidden + out_p) * 4)
    cp_kwargs = dict(dimension_semantics=("parallel",))
    if est_vmem > 14 * 1024 * 1024:
        cp_kwargs["vmem_limit_bytes"] = int(min(est_vmem + (8 << 20), 100 << 20))

    out = pl.pallas_call(
        _generator_kernel,
        out_shape=jax.ShapeDtypeStruct((b_pad, out_p), out_dtype),
        grid_spec=pltpu.PrefetchScalarGridSpec(
            num_scalar_prefetch=0,
            grid=grid,
            in_specs=[
                # Batch-tiled activation.
                pl.BlockSpec((tile, noise_size), lambda i: (i, 0)),
                # Weights / biases: constant index_map -> VMEM-resident across steps.
                pl.BlockSpec((noise_size, hidden), lambda i: (0, 0)),
                pl.BlockSpec((1, hidden), lambda i: (0, 0)),
                pl.BlockSpec((hidden, out_p), lambda i: (0, 0)),
                pl.BlockSpec((1, out_p), lambda i: (0, 0)),
            ],
            out_specs=pl.BlockSpec((tile, out_p), lambda i: (i, 0)),
        ),
        compiler_params=pltpu.CompilerParams(**cp_kwargs),
        cost_estimate=cost,
    )(noise, w1, b1, w2, b2)

    # Slice only when padding actually happened (each slice costs HBM traffic).
    if b_pad != B:
        out = out[:B]
    if out_p != output_size:
        out = out[:, :output_size]
    return out


def reference_forward(noise, w1, b1, w2, b2):
    h = noise.astype(jnp.float32) @ w1.astype(jnp.float32) + b1.reshape(1, -1)
    h = jnp.where(h >= 0.0, h, 0.2 * h)
    return h @ w2.astype(jnp.float32) + b2.reshape(1, -1)


def reference_forward_bf16(noise, w1, b1, w2, b2):
    # Mirrors the kernel's bf16 compute path: bf16 operands, f32 accumulation,
    # intermediate h re-quantized to bf16 before the second matmul.
    q = lambda a: a.astype(jnp.bfloat16).astype(jnp.float32)
    h = q(noise) @ q(w1) + b1.reshape(1, -1).astype(jnp.float32)
    h = jnp.where(h >= 0.0, h, 0.2 * h)
    return q(h) @ q(w2) + b2.reshape(1, -1).astype(jnp.float32)


if __name__ == "__main__":
    # Small, lane-dense shapes consistent with Generator(noise_size, output_size,
    # hidden_sizes=[hidden]).  Batch 30 (not a multiple of 8) exercises padding.
    batch = 30
    noise_size = 64
    hidden = 128
    output_size = 256

    key = jax.random.PRNGKey(0)
    k_noise, k_w1, k_b1, k_w2, k_b2 = jax.random.split(key, 5)

    noise = jax.random.normal(k_noise, (batch, noise_size), dtype=jnp.float32)

    # Deterministic parameter init (uniform, matching nn.Linear's fan-in scaling).
    lim1 = 1.0 / (noise_size ** 0.5)
    w1 = jax.random.uniform(k_w1, (noise_size, hidden), jnp.float32, -lim1, lim1)
    b1 = jax.random.uniform(k_b1, (hidden,), jnp.float32, -lim1, lim1)

    lim2 = 1.0 / (hidden ** 0.5)
    w2 = jax.random.uniform(k_w2, (hidden, output_size), jnp.float32, -lim2, lim2)
    b2 = jax.random.uniform(k_b2, (output_size,), jnp.float32, -lim2, lim2)

    # ---- f32 compute path: exact-ish match vs reference ----
    out = generator_forward(noise, w1, b1, w2, b2, compute_dtype=None)
    out = jax.block_until_ready(out)
    ref = reference_forward(noise, w1, b1, w2, b2)
    assert out.shape == (batch, output_size), out.shape
    assert jnp.allclose(out, ref, atol=1e-5, rtol=1e-5), "f32 mismatch vs reference"

    # ---- default bf16 compute path (MXU-native, half the input DMA bytes) ----
    out_bf = generator_forward(noise, w1, b1, w2, b2)
    out_bf = jax.block_until_ready(out_bf)
    ref_bf = reference_forward_bf16(noise, w1, b1, w2, b2)
    assert out_bf.shape == (batch, output_size), out_bf.shape
    assert out_bf.dtype == noise.dtype
    assert jnp.allclose(out_bf.astype(jnp.float32), ref_bf, atol=3e-2, rtol=3e-2), \
        "bf16 compute mismatch vs bf16 reference"

    # ---- bf16 output path (halves the dominant output-stream DMA bytes) ----
    out_b16 = generator_forward(noise, w1, b1, w2, b2, out_dtype=jnp.bfloat16)
    out_b16 = jax.block_until_ready(out_b16)
    assert out_b16.shape == (batch, output_size), out_b16.shape
    assert out_b16.dtype == jnp.bfloat16
    assert jnp.allclose(out_b16.astype(jnp.float32), ref_bf, atol=1e-1, rtol=1e-1), \
        "bf16-output mismatch vs bf16 reference"

    print("KERNEL_OK")
</pallas_src>

<mosaic_0001>
module attributes {stable_mosaic.version = 11 : i64} {
  func.func @_generator_kernel(%arg0: i32, %arg1: memref<16x64xf32, #tpu.memory_space<vmem>>, %arg2: memref<64x128xf32, #tpu.memory_space<vmem>>, %arg3: memref<1x128xf32, #tpu.memory_space<vmem>>, %arg4: memref<128x256xf32, #tpu.memory_space<vmem>>, %arg5: memref<1x256xf32, #tpu.memory_space<vmem>>, %arg6: memref<16x256xf32, #tpu.memory_space<vmem>>) attributes {dimension_semantics = [#tpu.dimension_semantics<parallel>], iteration_bounds = array<i64: 2>, scalar_prefetch = 0 : i64, scratch_operands = 0 : i64, tpu.core_type = #tpu.core_type<tc>, window_params = [{transform_indices = @transform_0, window_bounds = array<i64: 16, 64>}, {pipeline_mode = #tpu.pipeline_mode<synchronous>, transform_indices = @transform_1, window_bounds = array<i64: 64, 128>}, {pipeline_mode = #tpu.pipeline_mode<synchronous>, transform_indices = @transform_2, window_bounds = array<i64: 1, 128>}, {pipeline_mode = #tpu.pipeline_mode<synchronous>, transform_indices = @transform_3, window_bounds = array<i64: 128, 256>}, {pipeline_mode = #tpu.pipeline_mode<synchronous>, transform_indices = @transform_4, window_bounds = array<i64: 1, 256>}, {transform_indices = @transform_5, window_bounds = array<i64: 16, 256>}]} {
    %c0 = arith.constant 0 : index
    %c0_0 = arith.constant 0 : index
    %0 = vector.load %arg1[%c0, %c0_0] : memref<16x64xf32, #tpu.memory_space<vmem>>, vector<16x64xf32>
    %c0_1 = arith.constant 0 : index
    %c0_2 = arith.constant 0 : index
    %1 = vector.load %arg2[%c0_1, %c0_2] : memref<64x128xf32, #tpu.memory_space<vmem>>, vector<64x128xf32>
    %cst = arith.constant dense<0.000000e+00> : vector<16x128xf32>
    %2 = tpu.matmul %0, %1, %cst {dimension_numbers = #tpu.dot_dimension_numbers<[1], [0], [0], [1], [0, 0, 1, 1], [], []>} : vector<16x64xf32>, vector<64x128xf32>, vector<16x128xf32> -> vector<16x128xf32>
    %c0_3 = arith.constant 0 : index
    %c0_4 = arith.constant 0 : index
    %3 = vector.load %arg3[%c0_3, %c0_4] : memref<1x128xf32, #tpu.memory_space<vmem>>, vector<1x128xf32>
    %4 = vector.broadcast %3 : vector<1x128xf32> to vector<16x128xf32>
    %5 = arith.addf %2, %4 : vector<16x128xf32>
    %cst_5 = arith.constant 2.000000e-01 : f32
    %6 = vector.broadcast %cst_5 : f32 to vector<16x128xf32>
    %7 = arith.mulf %6, %5 : vector<16x128xf32>
    %8 = arith.maximumf %5, %7 : vector<16x128xf32>
    %c0_6 = arith.constant 0 : index
    %c0_7 = arith.constant 0 : index
    %9 = vector.load %arg4[%c0_6, %c0_7] : memref<128x256xf32, #tpu.memory_space<vmem>>, vector<128x256xf32>
    %cst_8 = arith.constant dense<0.000000e+00> : vector<16x256xf32>
    %10 = tpu.matmul %8, %9, %cst_8 {dimension_numbers = #tpu.dot_dimension_numbers<[1], [0], [0], [1], [0, 0, 1, 1], [], []>} : vector<16x128xf32>, vector<128x256xf32>, vector<16x256xf32> -> vector<16x256xf32>
    %c0_9 = arith.constant 0 : index
    %c0_10 = arith.constant 0 : index
    %11 = vector.load %arg5[%c0_9, %c0_10] : memref<1x256xf32, #tpu.memory_space<vmem>>, vector<1x256xf32>
    %12 = vector.broadcast %11 : vector<1x256xf32> to vector<16x256xf32>
    %13 = arith.addf %10, %12 : vector<16x256xf32>
    %c0_11 = arith.constant 0 : index
    %c0_12 = arith.constant 0 : index
    %14 = vector.load %arg6[%c0_11, %c0_12] : memref<16x256xf32, #tpu.memory_space<vmem>>, vector<16x256xf32>
    tpu.vector_store %arg6[%c0_11, %c0_12], %13 {strides = array<i32>} : memref<16x256xf32, #tpu.memory_space<vmem>>, vector<16x256xf32>,
    return
  }
  func.func @transform_0(%arg0: i32) -> (i32, i32) {
    %c0_i32 = arith.constant 0 : i32
    %c0_i32_0 = arith.constant 0 : i32
    return %arg0, %c0_i32 : i32, i32
  }
  func.func @transform_1(%arg0: i32) -> (i32, i32) {
    %c0_i32 = arith.constant 0 : i32
    %c0_i32_0 = arith.constant 0 : i32
    %c0_i32_1 = arith.constant 0 : i32
    return %c0_i32, %c0_i32_0 : i32, i32
  }
  func.func @transform_2(%arg0: i32) -> (i32, i32) {
    %c0_i32 = arith.constant 0 : i32
    %c0_i32_0 = arith.constant 0 : i32
    %c0_i32_1 = arith.constant 0 : i32
    return %c0_i32, %c0_i32_0 : i32, i32
  }
  func.func @transform_3(%arg0: i32) -> (i32, i32) {
    %c0_i32 = arith.constant 0 : i32
    %c0_i32_0 = arith.constant 0 : i32
    %c0_i32_1 = arith.constant 0 : i32
    return %c0_i32, %c0_i32_0 : i32, i32
  }
  func.func @transform_4(%arg0: i32) -> (i32, i32) {
    %c0_i32 = arith.constant 0 : i32
    %c0_i32_0 = arith.constant 0 : i32
    %c0_i32_1 = arith.constant 0 : i32
    return %c0_i32, %c0_i32_0 : i32, i32
  }
  func.func @transform_5(%arg0: i32) -> (i32, i32) {
    %c0_i32 = arith.constant 0 : i32
    %c0_i32_0 = arith.constant 0 : i32
    return %arg0, %c0_i32 : i32, i32
  }
}

</mosaic_0001>

<llo_original>
// kernel: tpu_custom_call.1
$region0: #{tpu_custom_call.1}
  #allocation0 [shape = 'u32[]', space=smem, size = 0x4, offset = 0x4, fixed_abs, tag = 'smem constant byte address 0x4 - core index']
  #allocation1 [shape = 'u32[144,128]{1,0:T(1,128)}', space=vmem, size = 0x12000, scoped, tag = 'internal scratch']
  %s0 = inlined_call_operand.hbm [shape: f32[32,64], index: 0, kind: input, shape index: {}]
  %s1 = inlined_call_operand.hbm [shape: f32[64,128], index: 1, kind: input, shape index: {}]
  %s2 = inlined_call_operand.vmem [shape: f32[1,128], index: 2, kind: input, shape index: {}]
  %s3 = inlined_call_operand.hbm [shape: f32[128,256], index: 3, kind: input, shape index: {}]
  %s4 = inlined_call_operand.vmem [shape: f32[1,256], index: 4, kind: input, shape index: {}]
  %s5 = inlined_call_operand.hbm [shape: f32[32,256], index: 5, kind: output, shape index: {}]
  %s6 = sld [smem:[#allocation0]]
  $region65: #{tpu_custom_call.1} parent=0
    _
  %s8 = ssub.s32 1, %s6
  %s9 = scalar_select 0, %s8, %s6
  $region1: #{tpu_custom_call.1} parent=0
    #allocation2 [shape = 'u8[16384]{0}', space=vmem, size = 0x4000, scoped, tag = 'input window, operand 0']
    #allocation3 [shape = 's32[2]{0}', space=sflag, size = 0x8, scoped, tag = 'scoped memory for tpu_custom_call.1']
    #allocation4 [shape = 's32[2]{0}', space=sflag, size = 0x8, scoped, tag = 'scoped memory for tpu_custom_call.1']
    #allocation5 [shape = 'u8[32768]{0}', space=vmem, size = 0x8000, scoped, tag = 'input window, operand 1, single buffered']
    #allocation6 [shape = 's32[1]{0}', space=sflag, size = 0x4, scoped, tag = 'scoped memory for tpu_custom_call.1']
    #allocation7 [shape = 'u8[131072]{0}', space=vmem, size = 0x20000, scoped, tag = 'input window, operand 3, single buffered']
    #allocation8 [shape = 'u8[32768]{0}', space=vmem, size = 0x8000, scoped, tag = 'output window, operand 0']
    %10 = vsyncpa [#allocation3], 0
    %s11 = scalar_lea.sflag [#allocation3], 1
    %12 = vsyncpa %s11, 0
    %13 = vsyncpa [#allocation6], 0
    %14 = vsyncpa [#allocation4], 0
    %s15 = scalar_lea.sflag [#allocation4], 1
    %16 = vsyncpa %s15, 0
    loop: start=0, step=1, limit=4
    $region2: #{tpu_custom_call.1} parent=1 // loop_pre_header
      _
    $region3: #{tpu_custom_call.1} parent=1 // loop_header
      %s18 = sphi 0, %s22
      %p19 = scmp.ge.s32.totalorder %s18, 4
      %s28 = sphi 0, %s30
      %s31 = sphi 0, %s28
      %s32 = sphi 0, %s31
      %s48 = sphi 0, %s32
      %s52 = sphi 0, %s52
      %s54 = sphi 0, %s52
      %s55 = sphi 0, %s54
      %s69 = sphi 0, %s55
      %s73 = sphi 0, %s73
      %s75 = sphi 0, %s73
      %s76 = sphi 0, %s75
      %s90 = sphi 0, %s76
      %s94 = sphi 0, %s94
      %s96 = sphi 0, %s94
      %s97 = sphi 0, %s96
      %s111 = sphi 0, %s97
      %s115 = sphi 0, %s115
      %s117 = sphi 0, %s115
      %s118 = sphi 0, %s117
      %s132 = sphi 0, %s118
      %s138 = sphi 0, %s140
      %s141 = sphi 0, %s138
      %s142 = sphi 0, %s141
      %s158 = sphi 0, %s142
    $region4: #{tpu_custom_call.1} parent=1 // loop_header_branch
      %21 = sbr.rel (%p19) target = $region8
    $region5: #{tpu_custom_call.1} parent=1 // loop_body
      %s23 = ssub.s32 %s18, 1
      %s24 = ssub.s32 %s18, 2
      %s25 = sadd.s32 %s18, 1
      %s26 = ssub.s32 %s18, %s25
      %p27 = scmp.eq.s32.totalorder %s26, 0
      %s29 = sadd.s32 %s28, 1
      %s30 = scalar_select %p27, %s28, %s29
      %p33 = pneg %p27
      %p34 = scmp.eq.s32.totalorder %s18, 1
      %p35 = por %p33, %p34
      %p36 = scmp.ne.s32.totalorder %s28, %s31
      %p37 = scmp.eq.s32.totalorder %s18, 0
      %p38 = por %p36, %p37
      %p39 = scmp.ne.s32.totalorder %s28, %s31
      %p40 = scmp.eq.s32.totalorder %s23, 1
      %p41 = por %p39, %p40
      %p42 = scmp.ne.s32.totalorder %s31, %s32
      %p43 = scmp.eq.s32.totalorder %s23, 0
      %p44 = por %p42, %p43
      %p45 = scmp.ne.s32.totalorder %s31, %s32
      %p46 = scmp.eq.s32.totalorder %s24, 1
      %p47 = por %p45, %p46
      %p49 = scmp.ne.s32.totalorder %s32, %s48
      %p50 = scmp.eq.s32.totalorder %s24, 0
      %p51 = por %p49, %p50
      %s53 = sadd.s32 %s52, 1
      %p56 = scmp.eq.s32.totalorder %s18, 1
      %p57 = scmp.ne.s32.totalorder %s52, %s54
      %p58 = scmp.eq.s32.totalorder %s18, 0
      %p59 = por %p57, %p58
      %p60 = scmp.ne.s32.totalorder %s52, %s54
      %p61 = scmp.eq.s32.totalorder %s23, 1
      %p62 = por %p60, %p61
      %p63 = scmp.ne.s32.totalorder %s54, %s55
      %p64 = scmp.eq.s32.totalorder %s23, 0
      %p65 = por %p63, %p64
      %p66 = scmp.ne.s32.totalorder %s54, %s55
      %p67 = scmp.eq.s32.totalorder %s24, 1
      %p68 = por %p66, %p67
      %p70 = scmp.ne.s32.totalorder %s55, %s69
      %p71 = scmp.eq.s32.totalorder %s24, 0
      %p72 = por %p70, %p71
      %s74 = sadd.s32 %s73, 1
      %p77 = scmp.eq.s32.totalorder %s18, 1
      %p78 = scmp.ne.s32.totalorder %s73, %s75
      %p79 = scmp.eq.s32.totalorder %s18, 0
      %p80 = por %p78, %p79
      %p81 = scmp.ne.s32.totalorder %s73, %s75
      %p82 = scmp.eq.s32.totalorder %s23, 1
      %p83 = por %p81, %p82
      %p84 = scmp.ne.s32.totalorder %s75, %s76
      %p85 = scmp.eq.s32.totalorder %s23, 0
      %p86 = por %p84, %p85
      %p87 = scmp.ne.s32.totalorder %s75, %s76
      %p88 = scmp.eq.s32.totalorder %s24, 1
      %p89 = por %p87, %p88
      %p91 = scmp.ne.s32.totalorder %s76, %s90
      %p92 = scmp.eq.s32.totalorder %s24, 0
      %p93 = por %p91, %p92
      %s95 = sadd.s32 %s94, 1
      %p98 = scmp.eq.s32.totalorder %s18, 1
      %p99 = scmp.ne.s32.totalorder %s94, %s96
      %p100 = scmp.eq.s32.totalorder %s18, 0
      %p101 = por %p99, %p100
      %p102 = scmp.ne.s32.totalorder %s94, %s96
      %p103 = scmp.eq.s32.totalorder %s23, 1
      %p104 = por %p102, %p103
      %p105 = scmp.ne.s32.totalorder %s96, %s97
      %p106 = scmp.eq.s32.totalorder %s23, 0
      %p107 = por %p105, %p106
      %p108 = scmp.ne.s32.totalorder %s96, %s97
      %p109 = scmp.eq.s32.totalorder %s24, 1
      %p110 = por %p108, %p109
      %p112 = scmp.ne.s32.totalorder %s97, %s111
      %p113 = scmp.eq.s32.totalorder %s24, 0
      %p114 = por %p112, %p113
      %s116 = sadd.s32 %s115, 1
      %p119 = scmp.eq.s32.totalorder %s18, 1
      %p120 = scmp.ne.s32.totalorder %s115, %s117
      %p121 = scmp.eq.s32.totalorder %s18, 0
      %p122 = por %p120, %p121
      %p123 = scmp.ne.s32.totalorder %s115, %s117
      %p124 = scmp.eq.s32.totalorder %s23, 1
      %p125 = por %p123, %p124
      %p126 = scmp.ne.s32.totalorder %s117, %s118
      %p127 = scmp.eq.s32.totalorder %s23, 0
      %p128 = por %p126, %p127
      %p129 = scmp.ne.s32.totalorder %s117, %s118
      %p130 = scmp.eq.s32.totalorder %s24, 1
      %p131 = por %p129, %p130
      %p133 = scmp.ne.s32.totalorder %s118, %s132
      %p134 = scmp.eq.s32.totalorder %s24, 0
      %p135 = por %p133, %p134
      %s136 = ssub.s32 %s18, %s25
      %p137 = scmp.eq.s32.totalorder %s136, 0
      %s139 = sadd.s32 %s138, 1
      %s140 = scalar_select %p137, %s138, %s139
      %p143 = pneg %p137
      %p144 = scmp.eq.s32.totalorder %s18, 1
      %p145 = por %p143, %p144
      %p146 = scmp.ne.s32.totalorder %s138, %s141
      %p147 = scmp.eq.s32.totalorder %s18, 0
      %p148 = por %p146, %p147
      %p149 = scmp.ne.s32.totalorder %s138, %s141
      %p150 = scmp.eq.s32.totalorder %s23, 1
      %p151 = por %p149, %p150
      %p152 = scmp.ne.s32.totalorder %s141, %s142
      %p153 = scmp.eq.s32.totalorder %s23, 0
      %p154 = por %p152, %p153
      %p155 = scmp.ne.s32.totalorder %s141, %s142
      %p156 = scmp.eq.s32.totalorder %s24, 1
      %p157 = por %p155, %p156
      %p159 = scmp.ne.s32.totalorder %s142, %s158
      %p160 = scmp.eq.s32.totalorder %s24, 0
      %p161 = por %p159, %p160
      %p162 = scmp.le.s32.totalorder 1, %s18
      %p163 = scmp.lt.s32.totalorder %s18, 3
      %p164 = pnand %p162, %p163
      %p165 = pneg %p164
      // Predicated region
      $region9: #{tpu_custom_call.1} parent=5 // pred_check
        _
      $region10: #{tpu_custom_call.1} parent=5 // pred_check_branch
        %167 = sbr.rel (%p164) target = $region12
      $region11: #{tpu_custom_call.1} parent=5 // pred_region
        %s168 = ssub.s32 %s18, 1
        // Predicated region
        $region13: #{tpu_custom_call.1} parent=11 // pred_check
          %p169 = pneg %p65
        $region14: #{tpu_custom_call.1} parent=11 // pred_check_branch
          %171 = sbr.rel (%p169) target = $region16
        $region15: #{tpu_custom_call.1} parent=11 // pred_region
          %s173 = ssub.s32 1024, 1024
          %174 = vsyncadd [#allocation6], %s173
          %s175 = sshll.u32 [#allocation5], 4
          %s176 = int_to_ptr.vmem [resolvable:$true] %s175
          %181 = dma.hbm_to_vmem [thread:$0]  %s1, 1024, %s176, [#allocation6], 128, 128, 8
        $region16: #{tpu_custom_call.1} parent=11 // pred_fallthru
          _
        // Predicated region
        $region17: #{tpu_custom_call.1} parent=11 // pred_check
          %p182 = pneg %p86
        $region18: #{tpu_custom_call.1} parent=11 // pred_check_branch
          %184 = sbr.rel (%p182) target = $region20
        $region19: #{tpu_custom_call.1} parent=11 // pred_region
          _
        $region20: #{tpu_custom_call.1} parent=11 // pred_fallthru
          _
        // Predicated region
        $region21: #{tpu_custom_call.1} parent=11 // pred_check
          %p185 = pneg %p107
        $region22: #{tpu_custom_call.1} parent=11 // pred_check_branch
          %187 = sbr.rel (%p185) target = $region24
        $region23: #{tpu_custom_call.1} parent=11 // pred_region
          %s189 = ssub.s32 4096, 4096
          %190 = vsyncadd [#allocation6], %s189
          %s191 = sshll.u32 [#allocation7], 4
          %s192 = int_to_ptr.vmem [resolvable:$true] %s191
          %197 = dma.hbm_to_vmem [thread:$0]  %s3, 4096, %s192, [#allocation6], 256, 256, 16
        $region24: #{tpu_custom_call.1} parent=11 // pred_fallthru
          _
        // Predicated region
        $region25: #{tpu_custom_call.1} parent=11 // pred_check
          %p198 = pneg %p128
        $region26: #{tpu_custom_call.1} parent=11 // pred_check_branch
          %200 = sbr.rel (%p198) target = $region28
        $region27: #{tpu_custom_call.1} parent=11 // pred_region
          _
        $region28: #{tpu_custom_call.1} parent=11 // pred_fallthru
          _
      $region12: #{tpu_custom_call.1} parent=5 // pred_fallthru
        _
      %p201 = scmp.lt.s32.totalorder %s18, 2
      // Predicated region
      $region29: #{tpu_custom_call.1} parent=5 // pred_check
        %p202 = pneg %p201
      $region30: #{tpu_custom_call.1} parent=5 // pred_check_branch
        %204 = sbr.rel (%p202) target = $region32
      $region31: #{tpu_custom_call.1} parent=5 // pred_region
        // Predicated region
        $region33: #{tpu_custom_call.1} parent=31 // pred_check
          %p205 = pneg %p38
        $region34: #{tpu_custom_call.1} parent=31 // pred_check_branch
          %207 = sbr.rel (%p205) target = $region36
        $region35: #{tpu_custom_call.1} parent=31 // pred_region
          %s208 = sand.u32 %s28, 1
          %s209 = scalar_lea.sflag [#allocation3], %s208
          %s210 = sand.u32 %s28, 1
          %s211 = smul.addr %s210, 16
          %s212 = scalar_lea.vmem [#allocation2], %s211
          %s213 = smul.u32 2, %s18
          %s215 = ssub.s32 256, 256
          %216 = vsyncadd %s209, %s215
          %s217 = smul.addr %s213, 128
          %s218 = scalar_lea.hbm %s0, %s217
          %s219 = sshll.u32 %s212, 4
          %s220 = int_to_ptr.vmem [resolvable:$true] %s219
          %225 = dma.hbm_to_vmem [thread:$0]  %s218, 256, %s220, %s209, 128, 128, 8
        $region36: #{tpu_custom_call.1} parent=31 // pred_fallthru
          _
      $region32: #{tpu_custom_call.1} parent=5 // pred_fallthru
        _
      %p226 = scmp.le.s32.totalorder 1, %s18
      %p227 = scmp.lt.s32.totalorder %s18, 3
      %p228 = pnand %p226, %p227
      %p229 = pneg %p228
      // Predicated region
      $region37: #{tpu_custom_call.1} parent=5 // pred_check
        _
      $region38: #{tpu_custom_call.1} parent=5 // pred_check_branch
        %231 = sbr.rel (%p228) target = $region40
      $region39: #{tpu_custom_call.1} parent=5 // pred_region
        %s232 = ssub.s32 %s18, 1
        %s233 = sand.u32 %s31, 1
        %s234 = scalar_lea.sflag [#allocation3], %s233
        %s235 = sand.u32 %s31, 1
        %s236 = smul.addr %s235, 16
        %s237 = scalar_lea.vmem [#allocation2], %s236
        // Predicated region
        $region41: #{tpu_custom_call.1} parent=39 // pred_check
          %p238 = pneg %p44
        $region42: #{tpu_custom_call.1} parent=39 // pred_check_branch
          %240 = sbr.rel (%p238) target = $region44
        $region43: #{tpu_custom_call.1} parent=39 // pred_region
          %241 = dma.done %s234, 256
        $region44: #{tpu_custom_call.1} parent=39 // pred_fallthru
          _
        // Predicated region
        $region45: #{tpu_custom_call.1} parent=39 // pred_check
          %p242 = pneg %p65
        $region46: #{tpu_custom_call.1} parent=39 // pred_check_branch
          %244 = sbr.rel (%p242) target = $region48
        $region47: #{tpu_custom_call.1} parent=39 // pred_region
          %245 = dma.done [#allocation6], 1024
        $region48: #{tpu_custom_call.1} parent=39 // pred_fallthru
          _
        // Predicated region
        $region49: #{tpu_custom_call.1} parent=39 // pred_check
          %p246 = pneg %p107
        $region50: #{tpu_custom_call.1} parent=39 // pred_check_branch
          %248 = sbr.rel (%p246) target = $region52
        $region51: #{tpu_custom_call.1} parent=39 // pred_region
          %249 = dma.done [#allocation6], 4096
        $region52: #{tpu_custom_call.1} parent=39 // pred_fallthru
          _
        %s250 = sand.u32 %s31, 1
        %s251 = scalar_lea.sflag [#allocation3], %s250
        %s252 = sand.u32 %s31, 1
        %s253 = smul.addr %s252, 16
        %s254 = scalar_lea.vmem [#allocation2], %s253
        %p255 = pneg %p44
        %p256 = pneg %p41
        %p257 = pneg %p65
        %p258 = pneg %p62
        %p259 = pneg %p86
        %p260 = pneg %p83
        %p261 = pneg %p107
        %p262 = pneg %p104
        %p263 = pneg %p128
        %p264 = pneg %p125
        %p265 = pneg %p154
        %p266 = pneg %p151
        %s267 = sand.u32 %s141, 1
        %s268 = scalar_lea.sflag [#allocation4], %s267
        %s269 = sand.u32 %s141, 1
        %s270 = smul.addr %s269, 32
        %s271 = scalar_lea.vmem [#allocation8], %s270
        %s272 = smul.u32 2, %s23
        %s273 = smul.u32 2, %s23
        %v274 = vld [vmem:[%s237] sm:$0xff]
        %v275 = vld [vmem:[%s237 + $0x8] sm:$0xff]
        %v276 = vld [vmem:[#allocation5] sm:$0xff]
        %v277 = vld [vmem:[#allocation5 + $0x8] sm:$0xff]
        %v278 = vld [vmem:[#allocation5 + $0x10] sm:$0xff]
        %v279 = vld [vmem:[#allocation5 + $0x18] sm:$0xff]
        %v280 = vld [vmem:[#allocation5 + $0x20] sm:$0xff]
        %v281 = vld [vmem:[#allocation5 + $0x28] sm:$0xff]
        %v282 = vld [vmem:[#allocation5 + $0x30] sm:$0xff]
        %v283 = vld [vmem:[#allocation5 + $0x38] sm:$0xff]
        %v284 = vld [vmem:[%s2] sm:$0x1]
        %v286 = vlaneseq
        %v287 = vshrl.u32 %v286, 7
        %v288 = vsub.s32 0, %v287
        %v289 = vrot.slane %v284, %v288
        %vm291 = vcmask 523264
        %v293 = vsel %vm291, %v274, 0
        %v296 = vsel %vm291, %v275, 0
        %298 = vmatprep.subr.mxu0 0.0
        %299 = vmatpush1.msra.mxu0 %v276
        %300 = vmatprep.subr.mxu0 0.0
        %301 = vmatpush1.msra.mxu0 %v277
        %302 = vmatprep.subr.mxu0 0.0
        %303 = vmatpush1.msra.mxu0 %v278
        %304 = vmatprep.subr.mxu0 0.0
        %305 = vmatpush1.msra.mxu0 %v279
        %306 = vmatprep.subr.mxu0 0.0
        %307 = vmatpush1.msra.mxu0 %v280
        %308 = vmatprep.subr.mxu0 0.0
        %309 = vmatpush1.msra.mxu0 %v281
        %310 = vmatprep.subr.mxu0 0.0
        %311 = vmatpush1.msra.mxu0 %v282
        %312 = vmatprep.subr.mxu0 0.0
        %313 = vmatpush1.msra.mxu0 %v283
        %314 = vmatprep.subr.mxu0 0.0
        %315 = vmatpush1.msra.mxu0 0.0
        %316 = vmatprep.subr.mxu0 0.0
        %317 = vmatpush1.msra.mxu0 0.0
        %318 = vmatprep.subr.mxu0 0.0
        %319 = vmatpush1.msra.mxu0 0.0
        %320 = vmatprep.subr.mxu0 0.0
        %321 = vmatpush1.msra.mxu0 0.0
        %322 = vmatprep.subr.mxu0 0.0
        %323 = vmatpush1.msra.mxu0 0.0
        %324 = vmatprep.subr.mxu0 0.0
        %325 = vmatpush1.msra.mxu0 0.0
        %326 = vmatprep.subr.mxu0 0.0
        %327 = vmatpush1.msra.mxu0 0.0
        %328 = vmatprep.subr.mxu0 0.0
        %329 = vmatpush1.msra.mxu0 0.0
        %330 = vmatprep.subr.mxu0 0.0
        %331 = vmatpush1.msra.mxu0 0.0
        %332 = vmatprep.subr.mxu0 0.0
        %333 = vmatpush1.msra.mxu0 0.0
        %334 = vmatprep.subr.mxu0 0.0
        %335 = vmatpush1.msra.mxu0 0.0
        %336 = vmatprep.subr.mxu0 0.0
        %337 = vmatpush1.msra.mxu0 0.0
        %338 = vmatprep.subr.mxu0 0.0
        %339 = vmatpush1.msra.mxu0 0.0
        %340 = vmatprep.subr.mxu0 0.0
        %341 = vmatpush1.msra.mxu0 0.0
        %342 = vmatprep.subr.mxu0 0.0
        %343 = vmatpush1.msra.mxu0 0.0
        %344 = vmatprep.subr.mxu0 0.0
        %345 = vmatpush1.msra.mxu0 0.0
        %346 = vmatprep.subr.mxu0 0.0
        %347 = vmatpush1.msra.mxu0 0.0
        %348 = vmatprep.subr.mxu0 0.0
        %349 = vmatpush1.msra.mxu0 0.0
        %350 = vmatprep.subr.mxu0 0.0
        %351 = vmatpush1.msra.mxu0 0.0
        %352 = vmatprep.subr.mxu0 0.0
        %353 = vmatpush1.msra.mxu0 0.0
        %354 = vmatprep.subr.mxu0 0.0
        %355 = vmatpush1.msra.mxu0 0.0
        %356 = vmatprep.subr.mxu0 0.0
        %357 = vmatpush1.msra.mxu0 0.0
        %358 = vmatprep.subr.mxu0 0.0
        %359 = vmatpush1.msra.mxu0 0.0
        %360 = vmatprep.subr.mxu0 0.0
        %361 = vmatpush1.msra.mxu0 0.0
        %362 = vmatprep.mubr.f32.mxu0 0.0
        %363 = vmatmul.mubr.f32.gmra.mrb[0].mxu0 %v293
        %v364 = vpop.f32.mrb[0].mxu0
        %v365 = vadd.f32 %v289, %v364
        %v366 = vpop.f32.mrb[0].mxu0
        %367 = vmatprep.mubr.f32.mxu0 0.0
        %368 = vmatmul.mubr.f32.gmra.mrb[0].mxu0 %v296
        %v369 = vpop.f32.mrb[0].mxu0
        %v370 = vadd.f32 %v289, %v369
        %v371 = vpop.f32.mrb[0].mxu0
        %372 = vdwg.mxu0
        %v373 = vmul.f32 %v365, 0.2
        %v374 = vmul.f32 %v370, 0.2
        %v375 = vmax.f32 %v365, %v373
        %v376 = vmax.f32 %v370, %v374
        %v377 = vld [vmem:[#allocation7] sm:$0xff]
        %v378 = vld [vmem:[#allocation7 + $0x8] sm:$0xff]
        %v379 = vld [vmem:[#allocation7 + $0x10] sm:$0xff]
        %v380 = vld [vmem:[#allocation7 + $0x18] sm:$0xff]
        %v381 = vld [vmem:[#allocation7 + $0x20] sm:$0xff]
        %v382 = vld [vmem:[#allocation7 + $0x28] sm:$0xff]
        %v383 = vld [vmem:[#allocation7 + $0x30] sm:$0xff]
        %v384 = vld [vmem:[#allocation7 + $0x38] sm:$0xff]
        %v385 = vld [vmem:[#allocation7 + $0x40] sm:$0xff]
        %v386 = vld [vmem:[#allocation7 + $0x48] sm:$0xff]
        %v387 = vld [vmem:[#allocation7 + $0x50] sm:$0xff]
        %v388 = vld [vmem:[#allocation7 + $0x58] sm:$0xff]
        %v389 = vld [vmem:[#allocation7 + $0x60] sm:$0xff]
        %v390 = vld [vmem:[#allocation7 + $0x68] sm:$0xff]
        %v391 = vld [vmem:[#allocation7 + $0x70] sm:$0xff]
        %v392 = vld [vmem:[#allocation7 + $0x78] sm:$0xff]
        %v393 = vld [vmem:[#allocation7 + $0x80] sm:$0xff]
        %v394 = vld [vmem:[#allocation7 + $0x88] sm:$0xff]
        %v395 = vld [vmem:[#allocation7 + $0x90] sm:$0xff]
        %v396 = vld [vmem:[#allocation7 + $0x98] sm:$0xff]
        %v397 = vld [vmem:[#allocation7 + $0xa0] sm:$0xff]
        %v398 = vld [vmem:[#allocation7 + $0xa8] sm:$0xff]
        %v399 = vld [vmem:[#allocation7 + $0xb0] sm:$0xff]
        %v400 = vld [vmem:[#allocation7 + $0xb8] sm:$0xff]
        %v401 = vld [vmem:[#allocation7 + $0xc0] sm:$0xff]
        %v402 = vld [vmem:[#allocation7 + $0xc8] sm:$0xff]
        %v403 = vld [vmem:[#allocation7 + $0xd0] sm:$0xff]
        %v404 = vld [vmem:[#allocation7 + $0xd8] sm:$0xff]
        %v405 = vld [vmem:[#allocation7 + $0xe0] sm:$0xff]
        %v406 = vld [vmem:[#allocation7 + $0xe8] sm:$0xff]
        %v407 = vld [vmem:[#allocation7 + $0xf0] sm:$0xff]
        %v408 = vld [vmem:[#allocation7 + $0xf8] sm:$0xff]
        %v409 = vld [vmem:[%s4] sm:$0x3]
        %v411 = vlaneseq
        %v412 = vshrl.u32 %v411, 7
        %v413 = vsub.s32 0, %v412
        %v414 = vrot.slane %v409, %v413
        %v415 = vlaneseq
        %v416 = vshrl.u32 %v415, 7
        %v417 = vsub.s32 1, %v416
        %v418 = vrot.slane %v409, %v417
        %421 = vmatprep.subr.mxu0 %v378
        %422 = vmatpush1.msra.mxu0 %v377
        %423 = vmatprep.subr.mxu0 %v380
        %424 = vmatpush1.msra.mxu0 %v379
        %425 = vmatprep.subr.mxu0 %v382
        %426 = vmatpush1.msra.mxu0 %v381
        %427 = vmatprep.subr.mxu0 %v384
        %428 = vmatpush1.msra.mxu0 %v383
        %429 = vmatprep.subr.mxu0 %v386
        %430 = vmatpush1.msra.mxu0 %v385
        %431 = vmatprep.subr.mxu0 %v388
        %432 = vmatpush1.msra.mxu0 %v387
        %433 = vmatprep.subr.mxu0 %v390
        %434 = vmatpush1.msra.mxu0 %v389
        %435 = vmatprep.subr.mxu0 %v392
        %436 = vmatpush1.msra.mxu0 %v391
        %437 = vmatprep.subr.mxu0 %v394
        %438 = vmatpush1.msra.mxu0 %v393
        %439 = vmatprep.subr.mxu0 %v396
        %440 = vmatpush1.msra.mxu0 %v395
        %441 = vmatprep.subr.mxu0 %v398
        %442 = vmatpush1.msra.mxu0 %v397
        %443 = vmatprep.subr.mxu0 %v400
        %444 = vmatpush1.msra.mxu0 %v399
        %445 = vmatprep.subr.mxu0 %v402
        %446 = vmatpush1.msra.mxu0 %v401
        %447 = vmatprep.subr.mxu0 %v404
        %448 = vmatpush1.msra.mxu0 %v403
        %449 = vmatprep.subr.mxu0 %v406
        %450 = vmatpush1.msra.mxu0 %v405
        %451 = vmatprep.subr.mxu0 %v408
        %452 = vmatpush1.msra.mxu0 %v407
        %453 = vmatprep.subr.mxu0 0.0
        %454 = vmatpush1.msra.mxu0 0.0
        %455 = vmatprep.subr.mxu0 0.0
        %456 = vmatpush1.msra.mxu0 0.0
        %457 = vmatprep.subr.mxu0 0.0
        %458 = vmatpush1.msra.mxu0 0.0
        %459 = vmatprep.subr.mxu0 0.0
        %460 = vmatpush1.msra.mxu0 0.0
        %461 = vmatprep.subr.mxu0 0.0
        %462 = vmatpush1.msra.mxu0 0.0
        %463 = vmatprep.subr.mxu0 0.0
        %464 = vmatpush1.msra.mxu0 0.0
        %465 = vmatprep.subr.mxu0 0.0
        %466 = vmatpush1.msra.mxu0 0.0
        %467 = vmatprep.subr.mxu0 0.0
        %468 = vmatpush1.msra.mxu0 0.0
        %469 = vmatprep.subr.mxu0 0.0
        %470 = vmatpush1.msra.mxu0 0.0
        %471 = vmatprep.subr.mxu0 0.0
        %472 = vmatpush1.msra.mxu0 0.0
        %473 = vmatprep.subr.mxu0 0.0
        %474 = vmatpush1.msra.mxu0 0.0
        %475 = vmatprep.subr.mxu0 0.0
        %476 = vmatpush1.msra.mxu0 0.0
        %477 = vmatprep.subr.mxu0 0.0
        %478 = vmatpush1.msra.mxu0 0.0
        %479 = vmatprep.subr.mxu0 0.0
        %480 = vmatpush1.msra.mxu0 0.0
        %481 = vmatprep.subr.mxu0 0.0
        %482 = vmatpush1.msra.mxu0 0.0
        %483 = vmatprep.subr.mxu0 0.0
        %484 = vmatpush1.msra.mxu0 0.0
        %485 = vmatprep.mubr.f32.mxu0 0.0
        %486 = vmatmul.mubr.f32.gmra.mrb[0].mxu0 %v375
        %v487 = vpop.f32.mrb[0].mxu0
        %v488 = vadd.f32 %v414, %v487
        %v489 = vpop.f32.mrb[0].mxu0
        %v490 = vadd.f32 %v418, %v489
        %491 = vmatprep.mubr.f32.mxu0 0.0
        %492 = vmatmul.mubr.f32.gmra.mrb[0].mxu0 %v376
        %v493 = vpop.f32.mrb[0].mxu0
        %v494 = vadd.f32 %v414, %v493
        %v495 = vpop.f32.mrb[0].mxu0
        %v496 = vadd.f32 %v418, %v495
        %497 = vdwg.mxu0
        %498 = vst [vmem:[%s271] sm:$0xff] %v488
        %499 = vst [vmem:[%s271 + $0x8] sm:$0xff] %v490
        %500 = vst [vmem:[%s271 + $0x10] sm:$0xff] %v494
        %501 = vst [vmem:[%s271 + $0x18] sm:$0xff] %v496
        %s502 = sand.u32 %s141, 1
        %s503 = scalar_lea.sflag [#allocation4], %s502
        %s504 = sand.u32 %s141, 1
        %s505 = smul.addr %s504, 32
        %s506 = scalar_lea.vmem [#allocation8], %s505
        // Predicated region
        $region53: #{tpu_custom_call.1} parent=39 // pred_check
          %p507 = pneg %p151
        $region54: #{tpu_custom_call.1} parent=39 // pred_check_branch
          %509 = sbr.rel (%p507) target = $region56
        $region55: #{tpu_custom_call.1} parent=39 // pred_region
          %s510 = smul.u32 2, %s23
          %s512 = ssub.s32 512, 512
          %513 = vsyncadd %s503, %s512
          %s514 = smul.addr %s510, 2
          %s515 = smul.addr %s514, 128
          %s516 = scalar_lea.hbm %s5, %s515
          %s517 = sshll.u32 %s506, 4
          %s518 = int_to_ptr.vmem [resolvable:$true] %s517
          %523 = dma.vmem_to_hbm [thread:$0]  %s518, 512, %s516, %s503, 256, 256, 16
        $region56: #{tpu_custom_call.1} parent=39 // pred_fallthru
          _
      $region40: #{tpu_custom_call.1} parent=5 // pred_fallthru
        _
      %p524 = scmp.le.s32.totalorder 2, %s18
      // Predicated region
      $region57: #{tpu_custom_call.1} parent=5 // pred_check
        %p525 = pneg %p524
      $region58: #{tpu_custom_call.1} parent=5 // pred_check_branch
        %527 = sbr.rel (%p525) target = $region60
      $region59: #{tpu_custom_call.1} parent=5 // pred_region
        %s528 = ssub.s32 %s18, 2
        // Predicated region
        $region61: #{tpu_custom_call.1} parent=59 // pred_check
          %p529 = pneg %p157
        $region62: #{tpu_custom_call.1} parent=59 // pred_check_branch
          %531 = sbr.rel (%p529) target = $region64
        $region63: #{tpu_custom_call.1} parent=59 // pred_region
          %s532 = sand.u32 %s142, 1
          %s533 = scalar_lea.sflag [#allocation4], %s532
          %s534 = sand.u32 %s142, 1
          %s535 = smul.addr %s534, 32
          %s536 = scalar_lea.vmem [#allocation8], %s535
          %537 = dma.done %s533, 512
        $region64: #{tpu_custom_call.1} parent=59 // pred_fallthru
          _
      $region60: #{tpu_custom_call.1} parent=5 // pred_fallthru
        _
    $region6: #{tpu_custom_call.1} parent=1 // loop_footer
      %s22 = sadd.s32 1, %s18
    $region7: #{tpu_custom_call.1} parent=1 // loop_footer_branch
      %17 = sbr.rel target = $region3
    $region8: #{tpu_custom_call.1} parent=1 // loop_exit
      _
    %538 = vsyncpa [#allocation3], 1
    %s539 = scalar_lea.sflag [#allocation3], 1
    %540 = vsyncpa %s539, 1
    %541 = vsyncpa [#allocation6], 1
    %542 = vsyncpa [#allocation4], 1
    %s543 = scalar_lea.sflag [#allocation4], 1
    %544 = vsyncpa %s543, 1

</llo_original>
